<compile_context>
chip_gen: v5e
topology: v5e:2x2
jax: 0.10.0
libtpu: 0.0.40
codegen_flags: <defaults>
</compile_context>

<pallas_src>
import functools
import math

import jax
import jax.numpy as jnp
from jax.experimental import pallas as pl
from jax.experimental.pallas import tpu as pltpu


def _round_up(x: int, m: int) -> int:
    return ((x + m - 1) // m) * m


def f2_kernel(x_ref, w0t_ref, b0_ref, w1t_ref, b1_ref, w2t_ref, b2_ref, o_ref):
    cd = w0t_ref.dtype  # compute dtype for MXU inputs (bf16 or f32)
    # Cast fused into the kernel (no separate XLA pad/cast pass over x in HBM).
    x = x_ref[...].astype(cd)
    # Layer 0: (tm, d) @ (d, h0_p) -> f32 acc, +bias, ReLU (epilogue in f32)
    h = jnp.dot(x, w0t_ref[...], preferred_element_type=jnp.float32)
    h = jnp.maximum(h + b0_ref[...], 0.0).astype(cd)
    # Layer 1: (tm, h0_p) @ (h0_p, h1_p)
    h = jnp.dot(h, w1t_ref[...], preferred_element_type=jnp.float32)
    h = jnp.maximum(h + b1_ref[...], 0.0).astype(cd)
    # Layer 2: (tm, h1_p) @ (h1_p, k_p)  (no activation, matches forward())
    o = jnp.dot(h, w2t_ref[...], preferred_element_type=jnp.float32)
    o_ref[...] = (o + b2_ref[...]).astype(o_ref.dtype)


def prepare_params(w0, b0, w1, b1, w2, b2, compute_dtype=jnp.bfloat16):
    """One-time preprocessing: transpose weights to (in, out), zero-pad the
    *output* feature dims (h0, h1, k) to multiples of 128 lanes, cast weights to
    the compute dtype.  The input dim d is left unpadded (block == full array
    dim is layout-legal, and padding d would only add wasted FLOPs/DMA).
    Biases stay f32."""
    h0, d = w0.shape
    h1 = w1.shape[0]
    k = w2.shape[0]
    h0_p, h1_p, k_p = (_round_up(v, 128) for v in (h0, h1, k))

    def pad2(a, rows, cols):
        return jnp.pad(a, ((0, rows - a.shape[0]), (0, cols - a.shape[1])))

    w0t = pad2(w0.T, d, h0_p).astype(compute_dtype)
    w1t = pad2(w1.T, h0_p, h1_p).astype(compute_dtype)
    w2t = pad2(w2.T, h1_p, k_p).astype(compute_dtype)
    b0r = pad2(b0.reshape(1, -1).astype(jnp.float32), 1, h0_p)
    b1r = pad2(b1.reshape(1, -1).astype(jnp.float32), 1, h1_p)
    b2r = pad2(b2.reshape(1, -1).astype(jnp.float32), 1, k_p)
    return w0t, b0r, w1t, b1r, w2t, b2r


def _pick_tm(n: int, compute_dtype) -> int:
    """Batch tile: large (256-granular, up to 1024) to amortize per-step pipeline
    overhead; >= 2 grid steps whenever possible so both v7x TensorCores get work;
    16-row granularity for bf16 (packed sublanes), 8 for f32."""
    tm_max = 1024
    sub = 16 if jnp.dtype(compute_dtype) == jnp.bfloat16 else 8
    if n >= 2 * 256:
        return min(tm_max, _round_up(-(-n // 2), 256))
    if n > sub:
        return _round_up(-(-n // 2), sub)
    return sub


@functools.partial(jax.jit, static_argnames=("out_k",))
def f2_forward(x, w0t, b0r, w1t, b1r, w2t, b2r, *, out_k):
    """x: (n, d) float32; params already prepared by prepare_params(). Returns (n, out_k) f32."""
    n, d = x.shape
    assert w0t.shape[0] == d
    h0_p = w0t.shape[1]
    h1_p = w1t.shape[1]
    k_p = w2t.shape[1]
    compute_dtype = w0t.dtype
    out_dtype = compute_dtype  # bf16 halves the padded writeback stream
    dt_bytes = jnp.dtype(compute_dtype).itemsize
    out_bytes = jnp.dtype(out_dtype).itemsize

    tm = _pick_tm(n, compute_dtype)
    num_m = -(-n // tm)  # non-divisible grid: last partial M-tile is masked on writeback

    const = lambda i: (0, 0)  # weights/biases stay resident across batch tiles
    in_specs = [
        pl.BlockSpec((tm, d), lambda i: (i, 0)),
        pl.BlockSpec((d, h0_p), const),
        pl.BlockSpec((1, h0_p), const),
        pl.BlockSpec((h0_p, h1_p), const),
        pl.BlockSpec((1, h1_p), const),
        pl.BlockSpec((h1_p, k_p), const),
        pl.BlockSpec((1, k_p), const),
    ]
    out_specs = pl.BlockSpec((tm, k_p), lambda i: (i, 0))

    n_p = tm * num_m
    flops = 2 * n_p * (d * h0_p + h0_p * h1_p + h1_p * k_p)
    bytes_accessed = (
        n * d * x.dtype.itemsize                               # x (read once, in place)
        + (d * h0_p + h0_p * h1_p + h1_p * k_p) * dt_bytes     # weights
        + (h0_p + h1_p + k_p) * 4                              # biases (f32)
        + n * k_p * out_bytes                                  # output
    )

    # VMEM footprint of one grid step: double-buffered x/out blocks, (pipeline-)
    # buffered weights+biases, f32 intermediates. Cap at 48 MiB (headroom under
    # v7x's 64 MiB per-TC VMEM).
    block_bytes = (
        2 * tm * d * x.dtype.itemsize
        + 2 * tm * k_p * out_bytes
        + 2 * ((d * h0_p + h0_p * h1_p + h1_p * k_p) * dt_bytes + (h0_p + h1_p + k_p) * 4)
        + 2 * tm * max(h0_p, h1_p) * 4
    )
    vmem_limit = int(min(48 * 1024 * 1024, max(16 * 1024 * 1024, 2 * block_bytes)))

    out = pl.pallas_call(
        f2_kernel,
        out_shape=jax.ShapeDtypeStruct((n, k_p), out_dtype),
        grid=(num_m,),
        in_specs=in_specs,
        out_specs=out_specs,
        compiler_params=pltpu.CompilerParams(
            dimension_semantics=("parallel",),  # v7x: shard batch tiles over 2 TCs
            vmem_limit_bytes=vmem_limit,
        ),
        cost_estimate=pl.CostEstimate(
            flops=flops, transcendentals=0, bytes_accessed=bytes_accessed),
    )(x, w0t, b0r, w1t, b1r, w2t, b2r)

    return out[:, :out_k].astype(jnp.float32)


def init_params(key, h0, h1, d, k):
    """Deterministic Uniform(-alpha, alpha) init, mirroring F2.__init__ (PyTorch layout)."""
    a0 = 1.0 / math.sqrt(d)
    a1 = 1.0 / math.sqrt(h0)
    a2 = 1.0 / math.sqrt(h1)
    ks = jax.random.split(key, 6)
    w0 = jax.random.uniform(ks[0], (h0, d), jnp.float32, -a0, a0)
    b0 = jax.random.uniform(ks[1], (h0,), jnp.float32, -a0, a0)
    w1 = jax.random.uniform(ks[2], (h1, h0), jnp.float32, -a1, a1)
    b1 = jax.random.uniform(ks[3], (h1,), jnp.float32, -a1, a1)
    w2 = jax.random.uniform(ks[4], (k, h1), jnp.float32, -a2, a2)
    b2 = jax.random.uniform(ks[5], (k,), jnp.float32, -a2, a2)
    return w0, b0, w1, b1, w2, b2


def f2_reference(x, w0, b0, w1, b1, w2, b2):
    # Direct transcription of the PyTorch forward (transposed convention).
    h = jnp.maximum(jnp.dot(w0, x.T) + b0[:, None], 0.0)
    h = jnp.maximum(jnp.dot(w1, h) + b1[:, None], 0.0)
    return (jnp.dot(w2, h) + b2[:, None]).T


if __name__ == "__main__":
    # Small MNIST-like shapes: batch n=8, input d=32, hidden h0=64, h1=32, classes k=16.
    n, d, h0, h1, k = 8, 32, 64, 32, 16

    key = jax.random.PRNGKey(0)
    key_x, key_p = jax.random.split(key)
    x = jax.random.normal(key_x, (n, d), jnp.float32)
    raw = init_params(key_p, h0, h1, d, k)
    ref = f2_reference(x, *raw)

    # f32 compute path (exact match to reference).
    params_f32 = prepare_params(*raw, compute_dtype=jnp.float32)
    out_f32 = jax.block_until_ready(f2_forward(x, *params_f32, out_k=k))
    assert out_f32.shape == (n, k)
    assert jnp.allclose(out_f32, ref, atol=1e-5, rtol=1e-5), "f32 Pallas output mismatch"

    # bf16 compute path (default; MXU-native matmuls, f32 accumulation, bf16 store).
    # Note: activations/outputs are re-quantized to bf16 between layers -> small
    # compounding error, covered by the 3e-2 tolerance.
    params_bf16 = prepare_params(*raw)  # compute_dtype defaults to bfloat16
    out_bf16 = jax.block_until_ready(f2_forward(x, *params_bf16, out_k=k))
    assert out_bf16.shape == (n, k)
    assert jnp.allclose(out_bf16, ref, atol=3e-2, rtol=3e-2), "bf16 Pallas output mismatch"

    print("KERNEL_OK")
</pallas_src>

<mosaic_0001>
module attributes {stable_mosaic.version = 11 : i64} {
  func.func @f2_kernel(%arg0: i32, %arg1: memref<8x32xf32, #tpu.memory_space<vmem>>, %arg2: memref<32x128xf32, #tpu.memory_space<vmem>>, %arg3: memref<1x128xf32, #tpu.memory_space<vmem>>, %arg4: memref<128x128xf32, #tpu.memory_space<vmem>>, %arg5: memref<1x128xf32, #tpu.memory_space<vmem>>, %arg6: memref<128x128xf32, #tpu.memory_space<vmem>>, %arg7: memref<1x128xf32, #tpu.memory_space<vmem>>, %arg8: memref<8x128xf32, #tpu.memory_space<vmem>>) attributes {dimension_semantics = [#tpu.dimension_semantics<parallel>], iteration_bounds = array<i64: 1>, scalar_prefetch = 0 : i64, scratch_operands = 0 : i64, tpu.core_type = #tpu.core_type<tc>, window_params = [{transform_indices = @transform_0, window_bounds = array<i64: 8, 32>}, {pipeline_mode = #tpu.pipeline_mode<synchronous>, transform_indices = @transform_1, window_bounds = array<i64: 32, 128>}, {pipeline_mode = #tpu.pipeline_mode<synchronous>, transform_indices = @transform_2, window_bounds = array<i64: 1, 128>}, {pipeline_mode = #tpu.pipeline_mode<synchronous>, transform_indices = @transform_3, window_bounds = array<i64: 128, 128>}, {pipeline_mode = #tpu.pipeline_mode<synchronous>, transform_indices = @transform_4, window_bounds = array<i64: 1, 128>}, {pipeline_mode = #tpu.pipeline_mode<synchronous>, transform_indices = @transform_5, window_bounds = array<i64: 128, 128>}, {pipeline_mode = #tpu.pipeline_mode<synchronous>, transform_indices = @transform_6, window_bounds = array<i64: 1, 128>}, {transform_indices = @transform_7, window_bounds = array<i64: 8, 128>}]} {
    %c0 = arith.constant 0 : index
    %c0_0 = arith.constant 0 : index
    %0 = vector.load %arg1[%c0, %c0_0] : memref<8x32xf32, #tpu.memory_space<vmem>>, vector<8x32xf32>
    %c0_1 = arith.constant 0 : index
    %c0_2 = arith.constant 0 : index
    %1 = vector.load %arg2[%c0_1, %c0_2] : memref<32x128xf32, #tpu.memory_space<vmem>>, vector<32x128xf32>
    %cst = arith.constant dense<0.000000e+00> : vector<8x128xf32>
    %2 = tpu.matmul %0, %1, %cst {dimension_numbers = #tpu.dot_dimension_numbers<[1], [0], [0], [1], [0, 0, 1, 1], [], []>} : vector<8x32xf32>, vector<32x128xf32>, vector<8x128xf32> -> vector<8x128xf32>
    %c0_3 = arith.constant 0 : index
    %c0_4 = arith.constant 0 : index
    %3 = vector.load %arg3[%c0_3, %c0_4] : memref<1x128xf32, #tpu.memory_space<vmem>>, vector<1x128xf32>
    %4 = vector.broadcast %3 : vector<1x128xf32> to vector<8x128xf32>
    %5 = arith.addf %2, %4 : vector<8x128xf32>
    %cst_5 = arith.constant 0.000000e+00 : f32
    %6 = vector.broadcast %cst_5 : f32 to vector<8x128xf32>
    %7 = arith.maximumf %5, %6 : vector<8x128xf32>
    %c0_6 = arith.constant 0 : index
    %c0_7 = arith.constant 0 : index
    %8 = vector.load %arg4[%c0_6, %c0_7] : memref<128x128xf32, #tpu.memory_space<vmem>>, vector<128x128xf32>
    %cst_8 = arith.constant dense<0.000000e+00> : vector<8x128xf32>
    %9 = tpu.matmul %7, %8, %cst_8 {dimension_numbers = #tpu.dot_dimension_numbers<[1], [0], [0], [1], [0, 0, 1, 1], [], []>} : vector<8x128xf32>, vector<128x128xf32>, vector<8x128xf32> -> vector<8x128xf32>
    %c0_9 = arith.constant 0 : index
    %c0_10 = arith.constant 0 : index
    %10 = vector.load %arg5[%c0_9, %c0_10] : memref<1x128xf32, #tpu.memory_space<vmem>>, vector<1x128xf32>
    %11 = vector.broadcast %10 : vector<1x128xf32> to vector<8x128xf32>
    %12 = arith.addf %9, %11 : vector<8x128xf32>
    %cst_11 = arith.constant 0.000000e+00 : f32
    %13 = vector.broadcast %cst_11 : f32 to vector<8x128xf32>
    %14 = arith.maximumf %12, %13 : vector<8x128xf32>
    %c0_12 = arith.constant 0 : index
    %c0_13 = arith.constant 0 : index
    %15 = vector.load %arg6[%c0_12, %c0_13] : memref<128x128xf32, #tpu.memory_space<vmem>>, vector<128x128xf32>
    %cst_14 = arith.constant dense<0.000000e+00> : vector<8x128xf32>
    %16 = tpu.matmul %14, %15, %cst_14 {dimension_numbers = #tpu.dot_dimension_numbers<[1], [0], [0], [1], [0, 0, 1, 1], [], []>} : vector<8x128xf32>, vector<128x128xf32>, vector<8x128xf32> -> vector<8x128xf32>
    %c0_15 = arith.constant 0 : index
    %c0_16 = arith.constant 0 : index
    %17 = vector.load %arg7[%c0_15, %c0_16] : memref<1x128xf32, #tpu.memory_space<vmem>>, vector<1x128xf32>
    %18 = vector.broadcast %17 : vector<1x128xf32> to vector<8x128xf32>
    %19 = arith.addf %16, %18 : vector<8x128xf32>
    %c0_17 = arith.constant 0 : index
    %c0_18 = arith.constant 0 : index
    %20 = vector.load %arg8[%c0_17, %c0_18] : memref<8x128xf32, #tpu.memory_space<vmem>>, vector<8x128xf32>
    tpu.vector_store %arg8[%c0_17, %c0_18], %19 {strides = array<i32>} : memref<8x128xf32, #tpu.memory_space<vmem>>, vector<8x128xf32>,
    return
  }
  func.func @transform_0(%arg0: i32) -> (i32, i32) {
    %c0_i32 = arith.constant 0 : i32
    %c0_i32_0 = arith.constant 0 : i32
    return %arg0, %c0_i32 : i32, i32
  }
  func.func @transform_1(%arg0: i32) -> (i32, i32) {
    %c0_i32 = arith.constant 0 : i32
    %c0_i32_0 = arith.constant 0 : i32
    %c0_i32_1 = arith.constant 0 : i32
    return %c0_i32, %c0_i32_0 : i32, i32
  }
  func.func @transform_2(%arg0: i32) -> (i32, i32) {
    %c0_i32 = arith.constant 0 : i32
    %c0_i32_0 = arith.constant 0 : i32
    %c0_i32_1 = arith.constant 0 : i32
    return %c0_i32, %c0_i32_0 : i32, i32
  }
  func.func @transform_3(%arg0: i32) -> (i32, i32) {
    %c0_i32 = arith.constant 0 : i32
    %c0_i32_0 = arith.constant 0 : i32
    %c0_i32_1 = arith.constant 0 : i32
    return %c0_i32, %c0_i32_0 : i32, i32
  }
  func.func @transform_4(%arg0: i32) -> (i32, i32) {
    %c0_i32 = arith.constant 0 : i32
    %c0_i32_0 = arith.constant 0 : i32
    %c0_i32_1 = arith.constant 0 : i32
    return %c0_i32, %c0_i32_0 : i32, i32
  }
  func.func @transform_5(%arg0: i32) -> (i32, i32) {
    %c0_i32 = arith.constant 0 : i32
    %c0_i32_0 = arith.constant 0 : i32
    %c0_i32_1 = arith.constant 0 : i32
    return %c0_i32, %c0_i32_0 : i32, i32
  }
  func.func @transform_6(%arg0: i32) -> (i32, i32) {
    %c0_i32 = arith.constant 0 : i32
    %c0_i32_0 = arith.constant 0 : i32
    %c0_i32_1 = arith.constant 0 : i32
    return %c0_i32, %c0_i32_0 : i32, i32
  }
  func.func @transform_7(%arg0: i32) -> (i32, i32) {
    %c0_i32 = arith.constant 0 : i32
    %c0_i32_0 = arith.constant 0 : i32
    return %arg0, %c0_i32 : i32, i32
  }
}

</mosaic_0001>

<llo_original>
// kernel: f2_forward.1
$region0: #{f2_forward.1}
  #allocation0 [shape = 'u32[]', space=smem, size = 0x4, offset = 0x4, fixed_abs, tag = 'smem constant byte address 0x4 - core index']
  #allocation1 [shape = 'u32[72,128]{1,0:T(1,128)}', space=vmem, size = 0x9000, scoped, tag = 'internal scratch']
  %s0 = inlined_call_operand.hbm [shape: f32[8,32], index: 0, kind: input, shape index: {}]
  %s1 = inlined_call_operand.hbm [shape: f32[32,128], index: 1, kind: input, shape index: {}]
  %s2 = inlined_call_operand.vmem [shape: f32[1,128], index: 2, kind: input, shape index: {}]
  %s3 = inlined_call_operand.hbm [shape: f32[128,128], index: 3, kind: input, shape index: {}]
  %s4 = inlined_call_operand.vmem [shape: f32[1,128], index: 4, kind: input, shape index: {}]
  %s5 = inlined_call_operand.hbm [shape: f32[128,128], index: 5, kind: input, shape index: {}]
  %s6 = inlined_call_operand.vmem [shape: f32[1,128], index: 6, kind: input, shape index: {}]
  %s7 = inlined_call_operand.hbm [shape: f32[8,128], index: 7, kind: output, shape index: {}]
  %s8 = sld [smem:[#allocation0]]
  $region54: #{f2_forward.1} parent=0
    _
  %s10 = ssub.s32 1, %s8
  %s11 = scalar_select 0, %s10, %s8
  $region1: #{f2_forward.1} parent=0
    #allocation2 [shape = 'u8[4096]{0}', space=vmem, size = 0x1000, scoped, tag = 'input window, operand 0, single buffered']
    #allocation3 [shape = 's32[1]{0}', space=sflag, size = 0x4, scoped, tag = 'scoped memory for f2_forward.1']
    #allocation4 [shape = 's32[1]{0}', space=sflag, size = 0x4, scoped, tag = 'scoped memory for f2_forward.1']
    #allocation5 [shape = 'u8[16384]{0}', space=vmem, size = 0x4000, scoped, tag = 'input window, operand 1, single buffered']
    #allocation6 [shape = 's32[1]{0}', space=sflag, size = 0x4, scoped, tag = 'scoped memory for f2_forward.1']
    #allocation7 [shape = 'u8[65536]{0}', space=vmem, size = 0x10000, scoped, tag = 'input window, operand 3, single buffered']
    #allocation8 [shape = 'u8[65536]{0}', space=vmem, size = 0x10000, scoped, tag = 'input window, operand 5, single buffered']
    #allocation9 [shape = 's32[1]{0}', space=sflag, size = 0x4, scoped, tag = 'scoped memory for f2_forward.1']
    #allocation10 [shape = 'u8[4096]{0}', space=vmem, size = 0x1000, scoped, tag = 'output window, operand 0, single buffered']
    %12 = vsyncpa [#allocation3], 0
    %13 = vsyncpa [#allocation6], 0
    %14 = vsyncpa [#allocation9], 0
    %15 = vsyncpa [#allocation4], 0
    // Predicated region
    $region2: #{f2_forward.1} parent=1 // pred_check
      _
    $region3: #{f2_forward.1} parent=1 // pred_check_branch
      %17 = sbr.rel (0) target = $region5
    $region4: #{f2_forward.1} parent=1 // pred_region
      %19 = vsyncadd [#allocation3], 0
      %s21 = sshll.u32 %s0, 4
      %s22 = int_to_ptr.hbm [resolvable:$true] %s21
      %s23 = sshll.u32 [#allocation2], 4
      %s24 = int_to_ptr.vmem [resolvable:$true] %s23
      %26 = dma.hbm_to_vmem [thread:$0]  %s22, 128, %s24, [#allocation3]
    $region5: #{f2_forward.1} parent=1 // pred_fallthru
      _
    // Predicated region
    $region6: #{f2_forward.1} parent=1 // pred_check
      _
    $region7: #{f2_forward.1} parent=1 // pred_check_branch
      %28 = sbr.rel (0) target = $region9
    $region8: #{f2_forward.1} parent=1 // pred_region
      %30 = vsyncadd [#allocation6], 0
      %s31 = sshll.u32 %s1, 4
      %s32 = int_to_ptr.hbm [resolvable:$true] %s31
      %s33 = sshll.u32 [#allocation5], 4
      %s34 = int_to_ptr.vmem [resolvable:$true] %s33
      %39 = dma.hbm_to_vmem [thread:$0]  %s32, 512, %s34, [#allocation6], 128, 128, 8
    $region9: #{f2_forward.1} parent=1 // pred_fallthru
      _
    // Predicated region
    $region10: #{f2_forward.1} parent=1 // pred_check
      _
    $region11: #{f2_forward.1} parent=1 // pred_check_branch
      %41 = sbr.rel (0) target = $region13
    $region12: #{f2_forward.1} parent=1 // pred_region
      _
    $region13: #{f2_forward.1} parent=1 // pred_fallthru
      _
    // Predicated region
    $region14: #{f2_forward.1} parent=1 // pred_check
      _
    $region15: #{f2_forward.1} parent=1 // pred_check_branch
      %43 = sbr.rel (0) target = $region17
    $region16: #{f2_forward.1} parent=1 // pred_region
      %45 = vsyncadd [#allocation6], 0
      %s46 = sshll.u32 %s3, 4
      %s47 = int_to_ptr.hbm [resolvable:$true] %s46
      %s48 = sshll.u32 [#allocation7], 4
      %s49 = int_to_ptr.vmem [resolvable:$true] %s48
      %54 = dma.hbm_to_vmem [thread:$0]  %s47, 2048, %s49, [#allocation6], 128, 128, 8
    $region17: #{f2_forward.1} parent=1 // pred_fallthru
      _
    // Predicated region
    $region18: #{f2_forward.1} parent=1 // pred_check
      _
    $region19: #{f2_forward.1} parent=1 // pred_check_branch
      %56 = sbr.rel (0) target = $region21
    $region20: #{f2_forward.1} parent=1 // pred_region
      _
    $region21: #{f2_forward.1} parent=1 // pred_fallthru
      _
    // Predicated region
    $region22: #{f2_forward.1} parent=1 // pred_check
      _
    $region23: #{f2_forward.1} parent=1 // pred_check_branch
      %58 = sbr.rel (0) target = $region25
    $region24: #{f2_forward.1} parent=1 // pred_region
      %60 = vsyncadd [#allocation9], 0
      %s61 = sshll.u32 %s5, 4
      %s62 = int_to_ptr.hbm [resolvable:$true] %s61
      %s63 = sshll.u32 [#allocation8], 4
      %s64 = int_to_ptr.vmem [resolvable:$true] %s63
      %69 = dma.hbm_to_vmem [thread:$0]  %s62, 2048, %s64, [#allocation9], 128, 128, 8
    $region25: #{f2_forward.1} parent=1 // pred_fallthru
      _
    // Predicated region
    $region26: #{f2_forward.1} parent=1 // pred_check
      _
    $region27: #{f2_forward.1} parent=1 // pred_check_branch
      %71 = sbr.rel (0) target = $region29
    $region28: #{f2_forward.1} parent=1 // pred_region
      _
    $region29: #{f2_forward.1} parent=1 // pred_fallthru
      _
    // Predicated region
    $region30: #{f2_forward.1} parent=1 // pred_check
      _
    $region31: #{f2_forward.1} parent=1 // pred_check_branch
      %73 = sbr.rel (0) target = $region33
    $region32: #{f2_forward.1} parent=1 // pred_region
      %75 = dma.done [#allocation3], 128
    $region33: #{f2_forward.1} parent=1 // pred_fallthru
      _
    // Predicated region
    $region34: #{f2_forward.1} parent=1 // pred_check
      _
    $region35: #{f2_forward.1} parent=1 // pred_check_branch
      %77 = sbr.rel (0) target = $region37
    $region36: #{f2_forward.1} parent=1 // pred_region
      %79 = dma.done [#allocation6], 512
    $region37: #{f2_forward.1} parent=1 // pred_fallthru
      _
    // Predicated region
    $region38: #{f2_forward.1} parent=1 // pred_check
      _
    $region39: #{f2_forward.1} parent=1 // pred_check_branch
      %81 = sbr.rel (0) target = $region41
    $region40: #{f2_forward.1} parent=1 // pred_region
      %83 = dma.done [#allocation6], 2048
    $region41: #{f2_forward.1} parent=1 // pred_fallthru
      _
    // Predicated region
    $region42: #{f2_forward.1} parent=1 // pred_check
      _
    $region43: #{f2_forward.1} parent=1 // pred_check_branch
      %85 = sbr.rel (0) target = $region45
    $region44: #{f2_forward.1} parent=1 // pred_region
      %87 = dma.done [#allocation9], 2048
    $region45: #{f2_forward.1} parent=1 // pred_fallthru
      _
    %v88 = vld [vmem:[#allocation2] sm:$0xff]
    %v89 = vld [vmem:[#allocation5] sm:$0xff]
    %v90 = vld [vmem:[#allocation5 + $0x8] sm:$0xff]
    %v91 = vld [vmem:[#allocation5 + $0x10] sm:$0xff]
    %v92 = vld [vmem:[#allocation5 + $0x18] sm:$0xff]
    %v93 = vld [vmem:[%s2] sm:$0x1]
    %v95 = vperm.slane %v93, 0
    %vm97 = vcmask 261120
    %v99 = vsel %vm97, %v88, 0
    %101 = vmatpush.msra.mxu0 0.0
    %102 = vmatpush.msra.mxu0 0.0
    %103 = vmatpush.msra.mxu0 0.0
    %104 = vmatpush.msra.mxu0 0.0
    %105 = vmatpush.msra.mxu0 0.0
    %106 = vmatpush.msra.mxu0 0.0
    %107 = vmatpush.msra.mxu0 0.0
    %108 = vmatpush.msra.mxu0 0.0
    %109 = vmatpush.msra.mxu0 0.0
    %110 = vmatpush.msra.mxu0 0.0
    %111 = vmatpush.msra.mxu0 0.0
    %112 = vmatpush.msra.mxu0 0.0
    %113 = vmatpush.msra.mxu0 %v92
    %114 = vmatpush.msra.mxu0 %v91
    %115 = vmatpush.msra.mxu0 %v90
    %116 = vmatpush.msra.mxu0 %v89
    %117 = vmatmul.f32.gmra.mxu0 %v99
    %v118 = vpop.f32.mrf.mxu0
    %v119 = vadd.f32 %v95, %v118
    %120 = vdwg.mxu0
    %v121 = vmax.f32 %v119, 0.0
    %v122 = vld [vmem:[#allocation7] sm:$0xff]
    %v123 = vld [vmem:[#allocation7 + $0x8] sm:$0xff]
    %v124 = vld [vmem:[#allocation7 + $0x10] sm:$0xff]
    %v125 = vld [vmem:[#allocation7 + $0x18] sm:$0xff]
    %v126 = vld [vmem:[#allocation7 + $0x20] sm:$0xff]
    %v127 = vld [vmem:[#allocation7 + $0x28] sm:$0xff]
    %v128 = vld [vmem:[#allocation7 + $0x30] sm:$0xff]
    %v129 = vld [vmem:[#allocation7 + $0x38] sm:$0xff]
    %v130 = vld [vmem:[#allocation7 + $0x40] sm:$0xff]
    %v131 = vld [vmem:[#allocation7 + $0x48] sm:$0xff]
    %v132 = vld [vmem:[#allocation7 + $0x50] sm:$0xff]
    %v133 = vld [vmem:[#allocation7 + $0x58] sm:$0xff]
    %v134 = vld [vmem:[#allocation7 + $0x60] sm:$0xff]
    %v135 = vld [vmem:[#allocation7 + $0x68] sm:$0xff]
    %v136 = vld [vmem:[#allocation7 + $0x70] sm:$0xff]
    %v137 = vld [vmem:[#allocation7 + $0x78] sm:$0xff]
    %v138 = vld [vmem:[%s4] sm:$0x1]
    %v140 = vperm.slane %v138, 0
    %142 = vmatpush.msra.mxu0 %v137
    %143 = vmatpush.msra.mxu0 %v136
    %144 = vmatpush.msra.mxu0 %v135
    %145 = vmatpush.msra.mxu0 %v134
    %146 = vmatpush.msra.mxu0 %v133
    %147 = vmatpush.msra.mxu0 %v132
    %148 = vmatpush.msra.mxu0 %v131
    %149 = vmatpush.msra.mxu0 %v130
    %150 = vmatpush.msra.mxu0 %v129
    %151 = vmatpush.msra.mxu0 %v128
    %152 = vmatpush.msra.mxu0 %v127
    %153 = vmatpush.msra.mxu0 %v126
    %154 = vmatpush.msra.mxu0 %v125
    %155 = vmatpush.msra.mxu0 %v124
    %156 = vmatpush.msra.mxu0 %v123
    %157 = vmatpush.msra.mxu0 %v122
    %158 = vmatmul.f32.gmra.mxu0 %v121
    %v159 = vpop.f32.mrf.mxu0
    %v160 = vadd.f32 %v140, %v159
    %161 = vdwg.mxu0
    %v162 = vmax.f32 %v160, 0.0
    %v163 = vld [vmem:[#allocation8] sm:$0xff]
    %v164 = vld [vmem:[#allocation8 + $0x8] sm:$0xff]
    %v165 = vld [vmem:[#allocation8 + $0x10] sm:$0xff]
    %v166 = vld [vmem:[#allocation8 + $0x18] sm:$0xff]
    %v167 = vld [vmem:[#allocation8 + $0x20] sm:$0xff]
    %v168 = vld [vmem:[#allocation8 + $0x28] sm:$0xff]
    %v169 = vld [vmem:[#allocation8 + $0x30] sm:$0xff]
    %v170 = vld [vmem:[#allocation8 + $0x38] sm:$0xff]
    %v171 = vld [vmem:[#allocation8 + $0x40] sm:$0xff]
    %v172 = vld [vmem:[#allocation8 + $0x48] sm:$0xff]
    %v173 = vld [vmem:[#allocation8 + $0x50] sm:$0xff]
    %v174 = vld [vmem:[#allocation8 + $0x58] sm:$0xff]
    %v175 = vld [vmem:[#allocation8 + $0x60] sm:$0xff]
    %v176 = vld [vmem:[#allocation8 + $0x68] sm:$0xff]
    %v177 = vld [vmem:[#allocation8 + $0x70] sm:$0xff]
    %v178 = vld [vmem:[#allocation8 + $0x78] sm:$0xff]
    %v179 = vld [vmem:[%s6] sm:$0x1]
    %v181 = vperm.slane %v179, 0
    %183 = vmatpush.msra.mxu0 %v178
    %184 = vmatpush.msra.mxu0 %v177
    %185 = vmatpush.msra.mxu0 %v176
    %186 = vmatpush.msra.mxu0 %v175
    %187 = vmatpush.msra.mxu0 %v174
    %188 = vmatpush.msra.mxu0 %v173
    %189 = vmatpush.msra.mxu0 %v172
    %190 = vmatpush.msra.mxu0 %v171
    %191 = vmatpush.msra.mxu0 %v170
    %192 = vmatpush.msra.mxu0 %v169
    %193 = vmatpush.msra.mxu0 %v168
    %194 = vmatpush.msra.mxu0 %v167
    %195 = vmatpush.msra.mxu0 %v166
    %196 = vmatpush.msra.mxu0 %v165
    %197 = vmatpush.msra.mxu0 %v164
    %198 = vmatpush.msra.mxu0 %v163
    %199 = vmatmul.f32.gmra.mxu0 %v162
    %v200 = vpop.f32.mrf.mxu0
    %v201 = vadd.f32 %v181, %v200
    %202 = vdwg.mxu0
    %203 = vst [vmem:[#allocation10] sm:$0xff] %v201
    // Predicated region
    $region46: #{f2_forward.1} parent=1 // pred_check
      _
    $region47: #{f2_forward.1} parent=1 // pred_check_branch
      %205 = sbr.rel (0) target = $region49
    $region48: #{f2_forward.1} parent=1 // pred_region
      %207 = vsyncadd [#allocation4], 0
      %s209 = sshll.u32 [#allocation10], 4
      %s210 = int_to_ptr.vmem [resolvable:$true] %s209
      %s211 = sshll.u32 %s7, 4
      %s212 = int_to_ptr.hbm [resolvable:$true] %s211
      %214 = dma.vmem_to_hbm [thread:$0]  %s210, 128, %s212, [#allocation4]
    $region49: #{f2_forward.1} parent=1 // pred_fallthru
      _
    // Predicated region
    $region50: #{f2_forward.1} parent=1 // pred_check
      _
    $region51: #{f2_forward.1} parent=1 // pred_check_branch
      %216 = sbr.rel (0) target = $region53
    $region52: #{f2_forward.1} parent=1 // pred_region
      %218 = dma.done [#allocation4], 128
    $region53: #{f2_forward.1} parent=1 // pred_fallthru
      _
    %219 = vsyncpa [#allocation3], 1
    %220 = vsyncpa [#allocation6], 1
    %221 = vsyncpa [#allocation9], 1
    %222 = vsyncpa [#allocation4], 1

</llo_original>
